<compile_context>
chip_gen: v5e
topology: v5e:2x2
jax: 0.10.0
libtpu: 0.0.40
codegen_flags: <defaults>
</compile_context>

<pallas_src>
import functools
import math

import jax
import jax.numpy as jnp
from jax.experimental import pallas as pl
from jax.experimental.pallas import tpu as pltpu


def _focal_loss_kernel(preds_ref, labels_ref, weight_ref, out_ref, acc_ref,
                       *, gamma, n, tile_n, tiles_per_core, eps):
    row = pl.program_id(0)            # core row ("parallel")
    i = pl.program_id(1)              # tile within this row ("arbitrary")

    @pl.when(i == 0)
    def _():
        acc_ref[...] = jnp.zeros_like(acc_ref)

    preds = preds_ref[...]            # (C, TILE_N) f32, classes on sublanes
    labels = labels_ref[...]          # (1, TILE_N) i32
    w = weight_ref[...]               # (C, 1)      f32

    # Validity mask for ragged N / duplicate clamped tiles (replaces wrapper padding).
    tile_idx = row * tiles_per_core + i
    lane = jax.lax.broadcasted_iota(jnp.int32, (1, tile_n), 1)
    valid = (tile_idx * tile_n + lane) < n                        # (1, TILE_N)

    # Class-hit mask (no float one-hot, no (C, TILE_N) fp products).
    cls = jax.lax.broadcasted_iota(jnp.int32, preds.shape, 0)
    hit = cls == labels                                           # (C, TILE_N)

    # log-sum-exp over classes: single (C, TILE_N) exp, one log per sample.
    m = jnp.max(preds, axis=0, keepdims=True)                     # (1, TILE_N)
    s = jnp.sum(jnp.exp(preds - m), axis=0, keepdims=True)        # (1, TILE_N)
    lse = m + jnp.log(s)                                          # (1, TILE_N)

    # Label-class logit (masked max) and class weight (masked sum): XLU reduces.
    logit_lab = jnp.max(jnp.where(hit, preds, -jnp.inf), axis=0, keepdims=True)
    w_lab = jnp.sum(jnp.where(hit, w, 0.0), axis=0, keepdims=True)

    # -log(p_label) without a second log; clamp reproduces torch's -log(p + eps) cap.
    neg_log = jnp.minimum(lse - logit_lab, jnp.float32(-math.log(eps)))
    p_lab = jnp.exp(logit_lab - lse)                              # softmax prob of label
    q = 1.0 - p_lab
    if isinstance(gamma, int) and gamma >= 0:
        focal = jnp.ones_like(q)
        for _ in range(gamma):                                    # static unroll, VALU only
            focal = focal * q
    else:
        # TODO(synk): float gamma with q == 0 goes through exp(gamma * log 0); clamp q if
        # that corner matters for a non-integer gamma.
        focal = q ** jnp.float32(gamma)

    loss = jnp.where(valid, w_lab * focal * neg_log, 0.0)         # zero on invalid lanes
    acc_ref[...] += loss                                          # lane-wise running sum

    @pl.when(i == pl.num_programs(1) - 1)
    def _():
        total = jnp.sum(acc_ref[...], axis=1, keepdims=True)      # (1, 1) per core row
        lane128 = jax.lax.broadcasted_iota(jnp.int32, (1, 128), 1)
        out_ref[...] = jnp.where(lane128 == 0, total, 0.0)        # partial sum in lane 0


def _pick_tile_n(n, c, tile_n=None, target_block_bytes=2 << 20, max_tile=65536):
    """Pick the lane count per tile: ~2 MiB of preds per block, multiple of 128."""
    if n < 128:
        return max(1, n)                       # minor block dim == full array dim (legal)
    if tile_n is None:
        tile_n = target_block_bytes // (4 * max(c, 1))
    tile_n = int(max(128, min(int(tile_n), max_tile)))
    tile_n = (tile_n // 128) * 128
    return min(tile_n, (n // 128) * 128)       # never exceed the array; partial edge is ok


def focal_loss(preds, labels, weight=None, gamma=2, tile_n=None, num_core_rows=2):
    """Pallas implementation of FocalLoss.forward(preds, labels) -> scalar mean loss."""
    preds = jnp.asarray(preds, jnp.float32)
    n, c = preds.shape
    if weight is None:
        weight = jnp.ones((c,), jnp.float32)   # torch default [1, 1] generalized to any C
    weight_col = jnp.asarray(weight, jnp.float32).reshape(c, 1)
    labels_row = jnp.asarray(labels, jnp.int32).reshape(1, n)

    # Lane-dense layout: batch on lanes, classes on sublanes.  No jnp.pad (masking in
    # kernel handles ragged N), so the only wrapper data movement is the transpose.
    # TODO(synk): if HLO shows this transpose as a separate HBM pass, feed (N, C)
    # directly and swizzle in-kernel via pltpu.einshape (XLU slot is mostly idle).
    preds_t = preds.T                          # (C, N)

    tile_n = _pick_tile_n(n, c, tile_n)
    n_tiles = -(-n // tile_n)
    num_core_rows = max(1, int(num_core_rows))
    tiles_per_core = -(-n_tiles // num_core_rows)
    eps = 1e-7

    def _tile(row, i):
        # Clamp duplicate tiles of the rectangular grid back in range; the kernel masks
        # their contribution to zero via the global sample index.
        return jnp.minimum(row * tiles_per_core + i, n_tiles - 1)

    kernel = functools.partial(_focal_loss_kernel, gamma=gamma, n=n, tile_n=tile_n,
                               tiles_per_core=tiles_per_core, eps=eps)
    out = pl.pallas_call(
        kernel,
        out_shape=jax.ShapeDtypeStruct((1, 128 * num_core_rows), jnp.float32),
        grid_spec=pltpu.PrefetchScalarGridSpec(
            num_scalar_prefetch=0,
            grid=(num_core_rows, tiles_per_core),
            in_specs=[
                pl.BlockSpec((c, tile_n), lambda row, i: (0, _tile(row, i))),   # preds
                pl.BlockSpec((1, tile_n), lambda row, i: (0, _tile(row, i))),   # labels
                pl.BlockSpec((c, 1), lambda row, i: (0, 0)),                    # weights
            ],
            out_specs=pl.BlockSpec((1, 128), lambda row, i: (0, row)),  # per-row partial
            scratch_shapes=[pltpu.VMEM((1, tile_n), jnp.float32)],
        ),
        compiler_params=pltpu.CompilerParams(
            dimension_semantics=("parallel", "arbitrary"),
        ),
    )(preds_t, labels_row, weight_col)
    return jnp.sum(out) / jnp.float32(n)


def focal_loss_ref(preds, labels, weight=None, gamma=2):
    """Pure-JAX reference mirroring the PyTorch forward."""
    preds = jnp.asarray(preds, jnp.float32)
    n, c = preds.shape
    if weight is None:
        weight = jnp.ones((c,), jnp.float32)
    weight = jnp.asarray(weight, jnp.float32)
    p = jax.nn.softmax(preds, axis=1)
    eps = 1e-7
    target = jax.nn.one_hot(labels, c, dtype=jnp.float32)
    ce = -jnp.log(p + eps) * target
    floss = ((1.0 - p) ** gamma) * ce
    floss = floss * weight.reshape(1, -1)
    return jnp.mean(jnp.sum(floss, axis=1))


if __name__ == "__main__":
    key = jax.random.PRNGKey(0)
    k1, k2, k3, k4 = jax.random.split(key, 4)

    # Case 1: shapes implied by the module defaults (C = 2, default weight [1, 1]).
    N, C = 8, 2
    preds = jax.random.normal(k1, (N, C), dtype=jnp.float32)
    labels = jax.random.randint(k2, (N,), 0, C, dtype=jnp.int32)
    out = jax.block_until_ready(focal_loss(preds, labels))
    ref = focal_loss_ref(preds, labels)
    assert jnp.allclose(out, ref, rtol=1e-5, atol=1e-5), (out, ref)

    # Case 2: ragged N (partial edge tile), multi-tile grid, custom class weights.
    N2, C2 = 333, 4
    preds2 = jax.random.normal(k3, (N2, C2), dtype=jnp.float32)
    labels2 = jax.random.randint(k4, (N2,), 0, C2, dtype=jnp.int32)
    w2 = jnp.asarray([0.25, 1.0, 2.0, 0.5], jnp.float32)
    out2 = jax.block_until_ready(focal_loss(preds2, labels2, weight=w2, gamma=2))
    ref2 = focal_loss_ref(preds2, labels2, weight=w2, gamma=2)
    assert jnp.allclose(out2, ref2, rtol=1e-5, atol=1e-5), (out2, ref2)

    print("KERNEL_OK")
</pallas_src>

<mosaic_0001>
module attributes {stable_mosaic.version = 11 : i64} {
  func.func @_focal_loss_kernel(%arg0: i32, %arg1: i32, %arg2: memref<2x8xf32, #tpu.memory_space<vmem>>, %arg3: memref<1x8xi32, #tpu.memory_space<vmem>>, %arg4: memref<2x1xf32, #tpu.memory_space<vmem>>, %arg5: memref<1x128xf32, #tpu.memory_space<vmem>>, %arg6: memref<1x8xf32, #tpu.memory_space<vmem>>) attributes {dimension_semantics = [#tpu.dimension_semantics<parallel>, #tpu.dimension_semantics<arbitrary>], iteration_bounds = array<i64: 2, 1>, scalar_prefetch = 0 : i64, scratch_operands = 1 : i64, tpu.core_type = #tpu.core_type<tc>, window_params = [{transform_indices = @transform_0, window_bounds = array<i64: 2, 8>}, {transform_indices = @transform_1, window_bounds = array<i64: 1, 8>}, {pipeline_mode = #tpu.pipeline_mode<synchronous>, transform_indices = @transform_2, window_bounds = array<i64: 2, 1>}, {transform_indices = @transform_3, window_bounds = array<i64: 1, 128>}]} {
    %c0_i32 = arith.constant 0 : i32
    %0 = arith.cmpi eq, %arg1, %c0_i32 : i32
    %1 = arith.extui %0 : i1 to i32
    %c0_i32_0 = arith.constant 0 : i32
    %2 = arith.cmpi ne, %1, %c0_i32_0 : i32
    scf.if %2 {
      %cst_22 = arith.constant 0.000000e+00 : f32
      %56 = vector.broadcast %cst_22 : f32 to vector<1x8xf32>
      %c0_23 = arith.constant 0 : index
      %c0_24 = arith.constant 0 : index
      %57 = vector.load %arg6[%c0_23, %c0_24] : memref<1x8xf32, #tpu.memory_space<vmem>>, vector<1x8xf32>
      tpu.vector_store %arg6[%c0_23, %c0_24], %56 {strides = array<i32>} : memref<1x8xf32, #tpu.memory_space<vmem>>, vector<1x8xf32>,
    } else {
    }
    %c0 = arith.constant 0 : index
    %c0_1 = arith.constant 0 : index
    %3 = vector.load %arg2[%c0, %c0_1] : memref<2x8xf32, #tpu.memory_space<vmem>>, vector<2x8xf32>
    %c0_2 = arith.constant 0 : index
    %c0_3 = arith.constant 0 : index
    %4 = vector.load %arg3[%c0_2, %c0_3] : memref<1x8xi32, #tpu.memory_space<vmem>>, vector<1x8xi32>
    %c0_4 = arith.constant 0 : index
    %c0_5 = arith.constant 0 : index
    %5 = vector.load %arg4[%c0_4, %c0_5] : memref<2x1xf32, #tpu.memory_space<vmem>>, vector<2x1xf32>
    %c1_i32 = arith.constant 1 : i32
    %6 = arith.muli %arg0, %c1_i32 : i32
    %7 = arith.addi %6, %arg1 : i32
    %8 = tpu.iota {dimensions = array<i32: 1>} : vector<1x8xi32>
    %c8_i32 = arith.constant 8 : i32
    %9 = arith.muli %7, %c8_i32 : i32
    %10 = vector.broadcast %9 : i32 to vector<1x8xi32>
    %11 = arith.addi %10, %8 : vector<1x8xi32>
    %c8_i32_6 = arith.constant 8 : i32
    %12 = vector.broadcast %c8_i32_6 : i32 to vector<1x8xi32>
    %13 = arith.cmpi slt, %11, %12 : vector<1x8xi32>
    %14 = tpu.iota {dimensions = array<i32: 0>} : vector<2x8xi32>
    %15 = vector.broadcast %4 : vector<1x8xi32> to vector<2x8xi32>
    %16 = arith.cmpi eq, %14, %15 : vector<2x8xi32>
    %cst = arith.constant dense<0xFF800000> : vector<8xf32>
    %17 = vector.multi_reduction <maximumf>, %3, %cst [0] : vector<2x8xf32> to vector<8xf32>
    %18 = vector.shape_cast %17 : vector<8xf32> to vector<1x8xf32>
    %19 = vector.broadcast %18 : vector<1x8xf32> to vector<2x8xf32>
    %20 = arith.subf %3, %19 : vector<2x8xf32>
    %21 = math.exp %20 : vector<2x8xf32>
    %cst_7 = arith.constant dense<0.000000e+00> : vector<8xf32>
    %22 = vector.multi_reduction <add>, %21, %cst_7 [0] : vector<2x8xf32> to vector<8xf32>
    %23 = vector.shape_cast %22 : vector<8xf32> to vector<1x8xf32>
    %24 = math.log %23 : vector<1x8xf32>
    %25 = arith.addf %18, %24 : vector<1x8xf32>
    %cst_8 = arith.constant 0xFF800000 : f32
    %26 = vector.broadcast %cst_8 : f32 to vector<2x8xf32>
    %27 = arith.select %16, %3, %26 : vector<2x8xi1>, vector<2x8xf32>
    %cst_9 = arith.constant dense<0xFF800000> : vector<8xf32>
    %28 = vector.multi_reduction <maximumf>, %27, %cst_9 [0] : vector<2x8xf32> to vector<8xf32>
    %29 = vector.shape_cast %28 : vector<8xf32> to vector<1x8xf32>
    %cst_10 = arith.constant 0.000000e+00 : f32
    %30 = vector.shape_cast %5 : vector<2x1xf32> to vector<2x1xf32>
    %31 = vector.broadcast %30 : vector<2x1xf32> to vector<2x8xf32>
    %32 = vector.broadcast %cst_10 : f32 to vector<2x8xf32>
    %33 = arith.select %16, %31, %32 : vector<2x8xi1>, vector<2x8xf32>
    %cst_11 = arith.constant dense<0.000000e+00> : vector<8xf32>
    %34 = vector.multi_reduction <add>, %33, %cst_11 [0] : vector<2x8xf32> to vector<8xf32>
    %35 = vector.shape_cast %34 : vector<8xf32> to vector<1x8xf32>
    %36 = arith.subf %25, %29 : vector<1x8xf32>
    %cst_12 = arith.constant 16.1180954 : f32
    %37 = vector.broadcast %cst_12 : f32 to vector<1x8xf32>
    %38 = arith.minimumf %36, %37 : vector<1x8xf32>
    %39 = arith.subf %29, %25 : vector<1x8xf32>
    %40 = math.exp %39 : vector<1x8xf32>
    %cst_13 = arith.constant 1.000000e+00 : f32
    %41 = vector.broadcast %cst_13 : f32 to vector<1x8xf32>
    %42 = arith.subf %41, %40 : vector<1x8xf32>
    %cst_14 = arith.constant 1.000000e+00 : f32
    %43 = vector.broadcast %cst_14 : f32 to vector<1x8xf32>
    %44 = arith.mulf %43, %42 : vector<1x8xf32>
    %45 = arith.mulf %44, %42 : vector<1x8xf32>
    %46 = arith.mulf %35, %45 : vector<1x8xf32>
    %47 = arith.mulf %46, %38 : vector<1x8xf32>
    %cst_15 = arith.constant 0.000000e+00 : f32
    %48 = vector.broadcast %cst_15 : f32 to vector<1x8xf32>
    %49 = arith.select %13, %47, %48 : vector<1x8xi1>, vector<1x8xf32>
    %c0_16 = arith.constant 0 : index
    %c0_17 = arith.constant 0 : index
    %50 = vector.load %arg6[%c0_16, %c0_17] : memref<1x8xf32, #tpu.memory_space<vmem>>, vector<1x8xf32>
    %51 = arith.addf %50, %49 : vector<1x8xf32>
    %c0_18 = arith.constant 0 : index
    %c0_19 = arith.constant 0 : index
    %52 = vector.load %arg6[%c0_18, %c0_19] : memref<1x8xf32, #tpu.memory_space<vmem>>, vector<1x8xf32>
    tpu.vector_store %arg6[%c0_18, %c0_19], %51 {strides = array<i32>} : memref<1x8xf32, #tpu.memory_space<vmem>>, vector<1x8xf32>,
    %c0_i32_20 = arith.constant 0 : i32
    %53 = arith.cmpi eq, %arg1, %c0_i32_20 : i32
    %54 = arith.extui %53 : i1 to i32
    %c0_i32_21 = arith.constant 0 : i32
    %55 = arith.cmpi ne, %54, %c0_i32_21 : i32
    scf.if %55 {
      %c0_22 = arith.constant 0 : index
      %c0_23 = arith.constant 0 : index
      %56 = vector.load %arg6[%c0_22, %c0_23] : memref<1x8xf32, #tpu.memory_space<vmem>>, vector<1x8xf32>
      %cst_24 = arith.constant dense<0.000000e+00> : vector<1xf32>
      %57 = vector.multi_reduction <add>, %56, %cst_24 [1] : vector<1x8xf32> to vector<1xf32>
      %58 = vector.shape_cast %57 : vector<1xf32> to vector<1x1xf32>
      %59 = tpu.iota {dimensions = array<i32: 1>} : vector<1x128xi32>
      %c0_i32_25 = arith.constant 0 : i32
      %60 = vector.broadcast %c0_i32_25 : i32 to vector<1x128xi32>
      %61 = arith.cmpi eq, %59, %60 : vector<1x128xi32>
      %cst_26 = arith.constant 0.000000e+00 : f32
      %62 = vector.shape_cast %58 : vector<1x1xf32> to vector<1x1xf32>
      %63 = vector.broadcast %62 : vector<1x1xf32> to vector<1x128xf32>
      %64 = vector.broadcast %cst_26 : f32 to vector<1x128xf32>
      %65 = arith.select %61, %63, %64 : vector<1x128xi1>, vector<1x128xf32>
      %c0_27 = arith.constant 0 : index
      %c0_28 = arith.constant 0 : index
      %66 = vector.load %arg5[%c0_27, %c0_28] : memref<1x128xf32, #tpu.memory_space<vmem>>, vector<1x128xf32>
      tpu.vector_store %arg5[%c0_27, %c0_28], %65 {strides = array<i32>} : memref<1x128xf32, #tpu.memory_space<vmem>>, vector<1x128xf32>,
    } else {
    }
    return
  }
  func.func @transform_0(%arg0: i32, %arg1: i32) -> (i32, i32) {
    %c1_i32 = arith.constant 1 : i32
    %0 = arith.muli %arg0, %c1_i32 : i32
    %1 = arith.addi %0, %arg1 : i32
    %c0_i32 = arith.constant 0 : i32
    %2 = arith.minsi %1, %c0_i32 : i32
    %c0_i32_0 = arith.constant 0 : i32
    %c0_i32_1 = arith.constant 0 : i32
    return %c0_i32_0, %2 : i32, i32
  }
  func.func @transform_1(%arg0: i32, %arg1: i32) -> (i32, i32) {
    %c1_i32 = arith.constant 1 : i32
    %0 = arith.muli %arg0, %c1_i32 : i32
    %1 = arith.addi %0, %arg1 : i32
    %c0_i32 = arith.constant 0 : i32
    %2 = arith.minsi %1, %c0_i32 : i32
    %c0_i32_0 = arith.constant 0 : i32
    %c0_i32_1 = arith.constant 0 : i32
    return %c0_i32_0, %2 : i32, i32
  }
  func.func @transform_2(%arg0: i32, %arg1: i32) -> (i32, i32) {
    %c0_i32 = arith.constant 0 : i32
    %c0_i32_0 = arith.constant 0 : i32
    %c0_i32_1 = arith.constant 0 : i32
    return %c0_i32, %c0_i32_0 : i32, i32
  }
  func.func @transform_3(%arg0: i32, %arg1: i32) -> (i32, i32) {
    %c0_i32 = arith.constant 0 : i32
    %c0_i32_0 = arith.constant 0 : i32
    return %c0_i32, %arg0 : i32, i32
  }
}

</mosaic_0001>

<llo_original>
// kernel: tpu_custom_call.1
$region0: #{tpu_custom_call.1}
  #allocation0 [shape = 'u32[]', space=smem, size = 0x4, offset = 0x4, fixed_abs, tag = 'smem constant byte address 0x4 - core index']
  #allocation1 [shape = 'u32[72,128]{1,0:T(1,128)}', space=vmem, size = 0x9000, scoped, tag = 'internal scratch']
  #allocation2 [shape = 'f32[1,8]{1,0:T(1,128)}', space=vmem, size = 0x200, scoped, tag = 'scratch operand']
  %s0 = inlined_call_operand.vmem [shape: f32[2,8], index: 0, kind: input, shape index: {}]
  %s1 = inlined_call_operand.vmem [shape: s32[1,8], index: 1, kind: input, shape index: {}]
  %s2 = inlined_call_operand.vmem [shape: f32[2,1], index: 2, kind: input, shape index: {}]
  %s3 = inlined_call_operand.hbm [shape: f32[1,256], index: 3, kind: output, shape index: {}]
  %s4 = sld [smem:[#allocation0]]
  $region53: #{tpu_custom_call.1} parent=0
    _
  %s6 = ssub.s32 1, %s4
  %s7 = scalar_select 0, %s6, %s4
  $region1: #{tpu_custom_call.1} parent=0
    #allocation3 [shape = 'u8[1024]{0}', space=vmem, size = 0x400, scoped, tag = 'output window, operand 0']
    #allocation4 [shape = 's32[2]{0}', space=sflag, size = 0x8, scoped, tag = 'scoped memory for tpu_custom_call.1']
    %8 = vsyncpa [#allocation4], 0
    %s9 = scalar_lea.sflag [#allocation4], 1
    %10 = vsyncpa %s9, 0
    loop: start=0, step=1, limit=4
    $region2: #{tpu_custom_call.1} parent=1 // loop_pre_header
      _
    $region3: #{tpu_custom_call.1} parent=1 // loop_header
      %s12 = sphi 0, %s16
      %p13 = scmp.ge.s32.totalorder %s12, 4
      %s19 = sphi 0, %s31
      %s20 = sphi 0, %s27
      %s21 = sphi 0, %s19
      %s22 = sphi 0, %s20
      %s23 = sphi 0, %s21
      %s24 = sphi 0, %s22
      %s40 = sphi 0, %s42
      %s43 = sphi 0, %s40
      %s44 = sphi 0, %s43
      %s60 = sphi 0, %s44
      %s72 = sphi 0, %s74
      %s75 = sphi 0, %s72
      %s76 = sphi 0, %s75
      %s92 = sphi 0, %s76
      %s96 = sphi 0, %s96
      %s98 = sphi 0, %s96
      %s99 = sphi 0, %s98
      %s113 = sphi 0, %s99
      %s119 = sphi 0, %s121
      %s122 = sphi 0, %s119
      %s123 = sphi 0, %s122
      %s139 = sphi 0, %s123
    $region4: #{tpu_custom_call.1} parent=1 // loop_header_branch
      %15 = sbr.rel (%p13) target = $region8
    $region5: #{tpu_custom_call.1} parent=1 // loop_body
      %s17 = ssub.s32 %s12, 1
      %s18 = ssub.s32 %s12, 2
      %s25 = sadd.s32 1, %s20
      %p26 = scmp.ge.s32.totalorder %s25, 1
      %s27 = scalar_select %p26, 0, %s25
      %s28 = sadd.s32 1, %s19
      %s29 = scalar_select %p26, %s28, %s19
      %p30 = scmp.ge.s32.totalorder %s29, 2
      %s31 = scalar_select %p30, 0, %s29
      %s32 = sadd.s32 %s19, %s20
      %p33 = scmp.lt.s32.totalorder %s32, 0
      %s34 = scalar_select %p33, %s32, 0
      %s35 = sadd.s32 %s31, %s27
      %p36 = scmp.lt.s32.totalorder %s35, 0
      %s37 = scalar_select %p36, %s35, 0
      %s38 = ssub.s32 %s34, %s37
      %p39 = scmp.eq.s32.totalorder %s38, 0
      %s41 = sadd.s32 %s40, 1
      %s42 = scalar_select %p39, %s40, %s41
      %p45 = pneg %p39
      %p46 = scmp.eq.s32.totalorder %s12, 1
      %p47 = por %p45, %p46
      %p48 = scmp.ne.s32.totalorder %s40, %s43
      %p49 = scmp.eq.s32.totalorder %s12, 0
      %p50 = por %p48, %p49
      %p51 = scmp.ne.s32.totalorder %s40, %s43
      %p52 = scmp.eq.s32.totalorder %s17, 1
      %p53 = por %p51, %p52
      %p54 = scmp.ne.s32.totalorder %s43, %s44
      %p55 = scmp.eq.s32.totalorder %s17, 0
      %p56 = por %p54, %p55
      %p57 = scmp.ne.s32.totalorder %s43, %s44
      %p58 = scmp.eq.s32.totalorder %s18, 1
      %p59 = por %p57, %p58
      %p61 = scmp.ne.s32.totalorder %s44, %s60
      %p62 = scmp.eq.s32.totalorder %s18, 0
      %p63 = por %p61, %p62
      %s64 = sadd.s32 %s19, %s20
      %p65 = scmp.lt.s32.totalorder %s64, 0
      %s66 = scalar_select %p65, %s64, 0
      %s67 = sadd.s32 %s31, %s27
      %p68 = scmp.lt.s32.totalorder %s67, 0
      %s69 = scalar_select %p68, %s67, 0
      %s70 = ssub.s32 %s66, %s69
      %p71 = scmp.eq.s32.totalorder %s70, 0
      %s73 = sadd.s32 %s72, 1
      %s74 = scalar_select %p71, %s72, %s73
      %p77 = pneg %p71
      %p78 = scmp.eq.s32.totalorder %s12, 1
      %p79 = por %p77, %p78
      %p80 = scmp.ne.s32.totalorder %s72, %s75
      %p81 = scmp.eq.s32.totalorder %s12, 0
      %p82 = por %p80, %p81
      %p83 = scmp.ne.s32.totalorder %s72, %s75
      %p84 = scmp.eq.s32.totalorder %s17, 1
      %p85 = por %p83, %p84
      %p86 = scmp.ne.s32.totalorder %s75, %s76
      %p87 = scmp.eq.s32.totalorder %s17, 0
      %p88 = por %p86, %p87
      %p89 = scmp.ne.s32.totalorder %s75, %s76
      %p90 = scmp.eq.s32.totalorder %s18, 1
      %p91 = por %p89, %p90
      %p93 = scmp.ne.s32.totalorder %s76, %s92
      %p94 = scmp.eq.s32.totalorder %s18, 0
      %p95 = por %p93, %p94
      %s97 = sadd.s32 %s96, 1
      %p100 = scmp.eq.s32.totalorder %s12, 1
      %p101 = scmp.ne.s32.totalorder %s96, %s98
      %p102 = scmp.eq.s32.totalorder %s12, 0
      %p103 = por %p101, %p102
      %p104 = scmp.ne.s32.totalorder %s96, %s98
      %p105 = scmp.eq.s32.totalorder %s17, 1
      %p106 = por %p104, %p105
      %p107 = scmp.ne.s32.totalorder %s98, %s99
      %p108 = scmp.eq.s32.totalorder %s17, 0
      %p109 = por %p107, %p108
      %p110 = scmp.ne.s32.totalorder %s98, %s99
      %p111 = scmp.eq.s32.totalorder %s18, 1
      %p112 = por %p110, %p111
      %p114 = scmp.ne.s32.totalorder %s99, %s113
      %p115 = scmp.eq.s32.totalorder %s18, 0
      %p116 = por %p114, %p115
      %s117 = ssub.s32 %s19, %s31
      %p118 = scmp.eq.s32.totalorder %s117, 0
      %s120 = sadd.s32 %s119, 1
      %s121 = scalar_select %p118, %s119, %s120
      %p124 = pneg %p118
      %p125 = scmp.eq.s32.totalorder %s12, 1
      %p126 = por %p124, %p125
      %p127 = scmp.ne.s32.totalorder %s119, %s122
      %p128 = scmp.eq.s32.totalorder %s12, 0
      %p129 = por %p127, %p128
      %p130 = scmp.ne.s32.totalorder %s119, %s122
      %p131 = scmp.eq.s32.totalorder %s17, 1
      %p132 = por %p130, %p131
      %p133 = scmp.ne.s32.totalorder %s122, %s123
      %p134 = scmp.eq.s32.totalorder %s17, 0
      %p135 = por %p133, %p134
      %p136 = scmp.ne.s32.totalorder %s122, %s123
      %p137 = scmp.eq.s32.totalorder %s18, 1
      %p138 = por %p136, %p137
      %p140 = scmp.ne.s32.totalorder %s123, %s139
      %p141 = scmp.eq.s32.totalorder %s18, 0
      %p142 = por %p140, %p141
      %p143 = scmp.le.s32.totalorder 1, %s12
      %p144 = scmp.lt.s32.totalorder %s12, 3
      %p145 = pnand %p143, %p144
      %p146 = pneg %p145
      // Predicated region
      $region9: #{tpu_custom_call.1} parent=5 // pred_check
        _
      $region10: #{tpu_custom_call.1} parent=5 // pred_check_branch
        %148 = sbr.rel (%p145) target = $region12
      $region11: #{tpu_custom_call.1} parent=5 // pred_region
        %s149 = ssub.s32 %s12, 1
        // Predicated region
        $region13: #{tpu_custom_call.1} parent=11 // pred_check
          %p150 = pneg %p109
        $region14: #{tpu_custom_call.1} parent=11 // pred_check_branch
          %152 = sbr.rel (%p150) target = $region16
        $region15: #{tpu_custom_call.1} parent=11 // pred_region
          _
        $region16: #{tpu_custom_call.1} parent=11 // pred_fallthru
          _
      $region12: #{tpu_custom_call.1} parent=5 // pred_fallthru
        _
      %p153 = scmp.lt.s32.totalorder %s12, 2
      // Predicated region
      $region17: #{tpu_custom_call.1} parent=5 // pred_check
        %p154 = pneg %p153
      $region18: #{tpu_custom_call.1} parent=5 // pred_check_branch
        %156 = sbr.rel (%p154) target = $region20
      $region19: #{tpu_custom_call.1} parent=5 // pred_region
        // Predicated region
        $region21: #{tpu_custom_call.1} parent=19 // pred_check
          %p157 = pneg %p50
        $region22: #{tpu_custom_call.1} parent=19 // pred_check_branch
          %159 = sbr.rel (%p157) target = $region24
        $region23: #{tpu_custom_call.1} parent=19 // pred_region
          %s160 = sadd.s32 %s19, %s20
          %p161 = scmp.lt.s32.totalorder %s160, 0
          %s162 = scalar_select %p161, %s160, 0
          %p163 = scmp.lt.s32.totalorder %s162, 0
          %s164 = scalar_select %p163, %s162, 0
          %s165 = smul.addr %s164, 2
          %s166 = scalar_lea.vmem %s0, %s165
          %s167 = sadd.s32 %s19, %s20
          %p168 = scmp.lt.s32.totalorder %s167, 0
          %s169 = scalar_select %p168, %s167, 0
        $region24: #{tpu_custom_call.1} parent=19 // pred_fallthru
          _
        // Predicated region
        $region25: #{tpu_custom_call.1} parent=19 // pred_check
          %p170 = pneg %p82
        $region26: #{tpu_custom_call.1} parent=19 // pred_check_branch
          %172 = sbr.rel (%p170) target = $region28
        $region27: #{tpu_custom_call.1} parent=19 // pred_region
          %s173 = sadd.s32 %s19, %s20
          %p174 = scmp.lt.s32.totalorder %s173, 0
          %s175 = scalar_select %p174, %s173, 0
          %p176 = scmp.lt.s32.totalorder %s175, 0
          %s177 = scalar_select %p176, %s175, 0
          %s178 = scalar_lea.vmem %s1, %s177
          %s179 = sadd.s32 %s19, %s20
          %p180 = scmp.lt.s32.totalorder %s179, 0
          %s181 = scalar_select %p180, %s179, 0
        $region28: #{tpu_custom_call.1} parent=19 // pred_fallthru
          _
      $region20: #{tpu_custom_call.1} parent=5 // pred_fallthru
        _
      %p182 = scmp.le.s32.totalorder 1, %s12
      %p183 = scmp.lt.s32.totalorder %s12, 3
      %p184 = pnand %p182, %p183
      %p185 = pneg %p184
      // Predicated region
      $region29: #{tpu_custom_call.1} parent=5 // pred_check
        _
      $region30: #{tpu_custom_call.1} parent=5 // pred_check_branch
        %187 = sbr.rel (%p184) target = $region32
      $region31: #{tpu_custom_call.1} parent=5 // pred_region
        %s188 = ssub.s32 %s12, 1
        %s189 = sadd.s32 %s21, %s22
        %p190 = scmp.lt.s32.totalorder %s189, 0
        %s191 = scalar_select %p190, %s189, 0
        %p192 = scmp.lt.s32.totalorder %s191, 0
        %s193 = scalar_select %p192, %s191, 0
        %s194 = smul.addr %s193, 2
        %s195 = scalar_lea.vmem %s0, %s194
        %p196 = pneg %p56
        %p197 = pneg %p53
        %s198 = sadd.s32 %s21, %s22
        %p199 = scmp.lt.s32.totalorder %s198, 0
        %s200 = scalar_select %p199, %s198, 0
        %p201 = scmp.lt.s32.totalorder %s200, 0
        %s202 = scalar_select %p201, %s200, 0
        %s203 = scalar_lea.vmem %s1, %s202
        %p204 = pneg %p88
        %p205 = pneg %p85
        %p206 = pneg %p109
        %p207 = pneg %p106
        %p208 = pneg %p135
        %p209 = pneg %p132
        %s210 = sand.u32 %s122, 1
        %s211 = scalar_lea.sflag [#allocation4], %s210
        %s212 = sand.u32 %s122, 1
        %s213 = scalar_lea.vmem [#allocation3], %s212
        %s214 = sadd.s32 %s21, %s22
        %p215 = scmp.lt.s32.totalorder %s214, 0
        %s216 = scalar_select %p215, %s214, 0
        %p217 = scmp.lt.s32.totalorder %s216, 0
        %s218 = scalar_select %p217, %s216, 0
        %s219 = smul.addr %s218, 2
        %s220 = scalar_lea.vmem %s0, %s219
        %s221 = sadd.s32 %s21, %s22
        %p222 = scmp.lt.s32.totalorder %s221, 0
        %s223 = scalar_select %p222, %s221, 0
        %s224 = sadd.s32 %s21, %s22
        %p225 = scmp.lt.s32.totalorder %s224, 0
        %s226 = scalar_select %p225, %s224, 0
        %p227 = scmp.lt.s32.totalorder %s226, 0
        %s228 = scalar_select %p227, %s226, 0
        %s229 = scalar_lea.vmem %s1, %s228
        %s230 = sadd.s32 %s21, %s22
        %p231 = scmp.lt.s32.totalorder %s230, 0
        %s232 = scalar_select %p231, %s230, 0
        %p233 = scmp.eq.s32.totalorder %s22, 0
        // Predicated region
        $region33: #{tpu_custom_call.1} parent=31 // pred_check
          %p234 = pneg %p233
        $region34: #{tpu_custom_call.1} parent=31 // pred_check_branch
          %236 = sbr.rel (%p234) target = $region36
        $region35: #{tpu_custom_call.1} parent=31 // pred_region
          %vm237 = vcmask 57344
          %238 = vst.msk [vmem:[#allocation2] sm:$0x1] %vm237, 0.0
        $region36: #{tpu_custom_call.1} parent=31 // pred_fallthru
          _
        %v239 = vld [vmem:[%s220] sm:$0x3]
        %v240 = vld [vmem:[%s229] sm:$0x1]
        %v241 = vld [vmem:[%s2] sm:$0x3]
        %s242 = sadd.s32 %s21, %s22
        %v243 = vlaneseq
        %v244 = vand.u32 %v243, 127
        %s245 = smul.u32 %s242, 8
        %v246 = vstv %s245
        %v247 = vadd.s32 %v246, %v244
        %vm248 = vcmp.lt.s32.totalorder %v247, 8
        %v249 = vlaneseq
        %v250 = vshrl.u32 %v249, 7
        %v251 = vperm.slane %v240, 0
        %vm252 = vcmp.eq.s32.totalorder %v250, %v251
        %vm253 = vcmask 58368
        %v254 = vsel %vm253, %v239, -inf
        %v255 = vrot.slane %v254, 4
        %v256 = vmax.f32 %v254, %v255
        %v257 = vrot.slane %v256, 2
        %v258 = vmax.f32 %v256, %v257
        %v259 = vrot.slane %v258, 1
        %v260 = vmax.f32 %v258, %v259
        %v261 = vsub.f32 %v239, %v260
        %v262 = vmul.f32 %v261, 1.442695
        %v263 = vpow.pop %v262
        %v264 = vsel %vm253, %v263, 0.0
        %v265 = vrot.slane %v264, 4
        %v266 = vadd.f32 %v264, %v265
        %v267 = vrot.slane %v266, 2
        %v268 = vadd.f32 %v266, %v267
        %v269 = vrot.slane %v268, 1
        %v270 = vadd.f32 %v268, %v269
        %v271 = vlog2.pop %v270
        %v272 = vmul.f32 %v271, 0.6931472
        %v273 = vadd.f32 %v260, %v272
        %v274 = vsel %vm252, %v239, -inf
        %v275 = vsel %vm253, %v274, -inf
        %v276 = vrot.slane %v275, 4
        %v277 = vmax.f32 %v275, %v276
        %v278 = vrot.slane %v277, 2
        %v279 = vmax.f32 %v277, %v278
        %v280 = vrot.slane %v279, 1
        %v281 = vmax.f32 %v279, %v280
        %283 = vset.pattern.permute.xlu0 0
        %284 = vperm.xlu0 %283, %v241
        %v285 = vpop.permute.xlu0 %284
        %v287 = vsel %vm252, %v285, 0.0
        %v288 = vsel %vm253, %v287, 0.0
        %v289 = vrot.slane %v288, 4
        %v290 = vadd.f32 %v288, %v289
        %v291 = vrot.slane %v290, 2
        %v292 = vadd.f32 %v290, %v291
        %v293 = vrot.slane %v292, 1
        %v294 = vadd.f32 %v292, %v293
        %v295 = vsub.f32 %v273, %v281
        %v296 = vmin.f32 %v295, 16.118095
        %v297 = vsub.f32 %v281, %v273
        %v298 = vmul.f32 %v297, 1.442695
        %v299 = vpow.pop %v298
        %v300 = vsub.f32 1.0, %v299
        %v301 = vmul.f32 %v300, %v300
        %v302 = vmul.f32 %v294, %v301
        %v303 = vmul.f32 %v302, %v296
        %v304 = vsel %vm248, %v303, 0.0
        %v305 = vld [vmem:[#allocation2] sm:$0x1]
        %v306 = vadd.f32 %v305, %v304
        %vm307 = vcmask 57344
        %308 = vst.msk [vmem:[#allocation2] sm:$0x1] %vm307, %v306
        // Predicated region
        $region37: #{tpu_custom_call.1} parent=31 // pred_check
          %p309 = pneg %p233
        $region38: #{tpu_custom_call.1} parent=31 // pred_check_branch
          %311 = sbr.rel (%p309) target = $region40
        $region39: #{tpu_custom_call.1} parent=31 // pred_region
          %v312 = vld [vmem:[#allocation2] sm:$0x1]
          %v313 = vsel %vm307, %v312, 0.0
          %314 = vadd.xlane.f32.xlu0 %v313
          %v315 = vpop.xlane.xlu0 %314
          %vm316 = vcmp.eq.s32.totalorder %v244, 0
          %v317 = vsel %vm316, %v315, 0.0
          %318 = vst [vmem:[%s213] sm:$0x1] %v317
        $region40: #{tpu_custom_call.1} parent=31 // pred_fallthru
          _
        %s319 = sand.u32 %s122, 1
        %s320 = scalar_lea.sflag [#allocation4], %s319
        %s321 = sand.u32 %s122, 1
        %s322 = scalar_lea.vmem [#allocation3], %s321
        // Predicated region
        $region41: #{tpu_custom_call.1} parent=31 // pred_check
          %p323 = pneg %p132
        $region42: #{tpu_custom_call.1} parent=31 // pred_check_branch
          %325 = sbr.rel (%p323) target = $region44
        $region43: #{tpu_custom_call.1} parent=31 // pred_region
          %327 = vsyncadd %s320, 0
          %s328 = scalar_lea.hbm %s3, %s21
          %s330 = sshll.u32 %s322, 4
          %s331 = int_to_ptr.vmem [resolvable:$true] %s330
          %s332 = sshll.u32 %s328, 4
          %s333 = int_to_ptr.hbm [resolvable:$true] %s332
          %335 = dma.vmem_to_hbm [thread:$0]  %s331, 16, %s333, %s320
        $region44: #{tpu_custom_call.1} parent=31 // pred_fallthru
          _
      $region32: #{tpu_custom_call.1} parent=5 // pred_fallthru
        _
      %p336 = scmp.le.s32.totalorder 2, %s12
      // Predicated region
      $region45: #{tpu_custom_call.1} parent=5 // pred_check
        %p337 = pneg %p336
      $region46: #{tpu_custom_call.1} parent=5 // pred_check_branch
        %339 = sbr.rel (%p337) target = $region48
      $region47: #{tpu_custom_call.1} parent=5 // pred_region
        %s340 = ssub.s32 %s12, 2
        // Predicated region
        $region49: #{tpu_custom_call.1} parent=47 // pred_check
          %p341 = pneg %p138
        $region50: #{tpu_custom_call.1} parent=47 // pred_check_branch
          %343 = sbr.rel (%p341) target = $region52
        $region51: #{tpu_custom_call.1} parent=47 // pred_region
          %s344 = sand.u32 %s123, 1
          %s345 = scalar_lea.sflag [#allocation4], %s344
          %s346 = sand.u32 %s123, 1
          %s347 = scalar_lea.vmem [#allocation3], %s346
          %349 = dma.done %s345, 16
        $region52: #{tpu_custom_call.1} parent=47 // pred_fallthru
          _
      $region48: #{tpu_custom_call.1} parent=5 // pred_fallthru
        _
    $region6: #{tpu_custom_call.1} parent=1 // loop_footer
      %s16 = sadd.s32 1, %s12
    $region7: #{tpu_custom_call.1} parent=1 // loop_footer_branch
      %11 = sbr.rel target = $region3
    $region8: #{tpu_custom_call.1} parent=1 // loop_exit
      _
    %350 = vsyncpa [#allocation4], 1
    %s351 = scalar_lea.sflag [#allocation4], 1
    %352 = vsyncpa %s351, 1

</llo_original>
